<compile_context>
chip_gen: v7x
topology: tpu7x:2x2x1
jax: 0.10.0
libtpu: 0.0.40
codegen_flags: <defaults>
</compile_context>

<pallas_src>
import functools

import jax
import jax.numpy as jnp
from jax.experimental import pallas as pl
from jax.experimental.pallas import tpu as pltpu

EPS = 1e-5
MOMENTUM = 0.9


def _vmem_budgets():
    """(tile-selection budget, vmem_limit_bytes) sized from the actual chip."""
    try:
        info = pltpu.get_tpu_info()
        cap = int(getattr(info, "vmem_capacity_bytes", 64 * 1024 * 1024))
    except Exception:
        cap = 64 * 1024 * 1024  # conservative fallback (v7x per-TC VMEM)
    limit = min((3 * cap) // 4, 96 * 1024 * 1024)   # 48 MiB on v7x, 96 MiB on v5e/v6e
    budget = min(cap // 2, 48 * 1024 * 1024)        # working set incl. double-buffering
    return budget, limit


def _pick_block_rows(S, N, budget_bytes):
    """Sublane rows (of 128 lanes each) per block along the per-channel spatial axis."""
    # Per row of a block: X in (N,128) + Y out (N,128) + new_mm/new_mv out (1,128 each),
    # all f32, double-buffered by the Pallas pipeline.
    per_row = (2 * N + 2) * 128 * 4 * 2
    cap = max(8, budget_bytes // per_row)
    if S <= cap:
        return S                                   # full-extent block is always legal
    return max(8, (min(S, cap) // 8) * 8)          # multiple of 8; partial last block OK


def _bn_kernel(gamma_ref, beta_ref, mm_ref, mv_ref, x_ref,
               y_ref, new_mm_ref, new_mv_ref, *, eps, momentum):
    """Param refs: (C,) f32 in SMEM.  x_ref: (N, 1, TS, 128) f32 in VMEM."""
    c = pl.program_id(0)                                   # channel grid coordinate
    x = x_ref[...]                                         # (N, 1, TS, 128)
    inv_n = 1.0 / x.shape[0]
    # Reduce over the leading (batch) axis: pure VPU adds, no cross-lane XLU work.
    mean = jnp.sum(x, axis=0, keepdims=True) * inv_n       # (1, 1, TS, 128)
    diff = x - mean
    var = jnp.sum(diff * diff, axis=0, keepdims=True) * inv_n   # biased, two-pass
    scale = gamma_ref[c] * jax.lax.rsqrt(var + eps)        # rsqrt on stats only (EUP)
    y_ref[...] = diff * scale + beta_ref[c]                # exact reference form
    new_mm_ref[...] = momentum * mm_ref[c] + (1.0 - momentum) * mean
    new_mv_ref[...] = momentum * mv_ref[c] + (1.0 - momentum) * var


def batch_norm_forward(X, gamma, beta, moving_mean, moving_var,
                       eps=EPS, momentum=MOMENTUM, block_rows=None):
    """X: (N, C, H, W) f32.  gamma/beta/moving_*: (1, C, 1, 1) f32.

    Returns (Y, new_moving_mean, new_moving_var) with Y: (N, C, H, W) and new stats
    (1, C, H, W) (the module's momentum update broadcasts the (1,C,1,1) running stats
    against the per-position (C,H,W) batch statistics).
    """
    N, C, H, W = X.shape
    HW = H * W
    S = pl.cdiv(HW, 128)              # 128-lane rows per channel
    HW_pad = S * 128

    x = X.reshape(N, C, HW)
    if HW_pad != HW:
        # Zero-pad the spatial axis so the lane axis is fully dense; padded positions
        # compute harmless stats (mean=0, var=0) and are sliced away below.
        x = jnp.pad(x, ((0, 0), (0, 0), (0, HW_pad - HW)))
    x = x.reshape(N, C, S, 128)

    # Per-channel params / running stats as (C,) scalars in SMEM — no HBM broadcast.
    g = gamma.reshape(C)
    b = beta.reshape(C)
    mm = moving_mean.reshape(C)
    mv = moving_var.reshape(C)

    budget, vmem_limit = _vmem_budgets()
    if block_rows is not None and block_rows <= S and \
            (block_rows % 8 == 0 or block_rows == S):
        TS = block_rows
    else:
        TS = _pick_block_rows(S, N, budget)
    grid_s = pl.cdiv(S, TS)
    # Guarantee >= 2 grid steps when the whole problem would fit one tile so a v7x
    # megacore can shard it (costs only ~0.35 us/step extra on single-TC chips).
    if C * grid_s == 1 and S >= 16:
        TS = max(8, (S // 2) // 8 * 8)
        grid_s = pl.cdiv(S, TS)
    grid = (C, grid_s)

    x_block = pl.BlockSpec((N, 1, TS, 128), lambda c, s: (0, c, s, 0))
    r_block = pl.BlockSpec((1, 1, TS, 128), lambda c, s: (0, c, s, 0))
    smem_spec = pl.BlockSpec(memory_space=pltpu.MemorySpace.SMEM)

    kernel = functools.partial(_bn_kernel, eps=eps, momentum=momentum)

    y, new_mm, new_mv = pl.pallas_call(
        kernel,
        out_shape=(
            jax.ShapeDtypeStruct((N, C, S, 128), X.dtype),
            jax.ShapeDtypeStruct((1, C, S, 128), X.dtype),
            jax.ShapeDtypeStruct((1, C, S, 128), X.dtype),
        ),
        grid=grid,
        in_specs=[smem_spec, smem_spec, smem_spec, smem_spec, x_block],
        out_specs=(x_block, r_block, r_block),
        compiler_params=pltpu.CompilerParams(
            dimension_semantics=("parallel", "parallel"),
            vmem_limit_bytes=vmem_limit,
        ),
    )(g, b, mm, mv, x)

    y = y.reshape(N, C, HW_pad)
    new_mm = new_mm.reshape(1, C, HW_pad)
    new_mv = new_mv.reshape(1, C, HW_pad)
    if HW_pad != HW:
        y = y[:, :, :HW]
        new_mm = new_mm[:, :, :HW]
        new_mv = new_mv[:, :, :HW]
    return (y.reshape(N, C, H, W),
            new_mm.reshape(1, C, H, W),
            new_mv.reshape(1, C, H, W))


def _reference(X, gamma, beta, mm, mv, eps=EPS, momentum=MOMENTUM):
    mean = X.mean(axis=0)                       # (C, H, W)
    var = ((X - mean) ** 2).mean(axis=0)        # (C, H, W)
    x_hat = (X - mean) / jnp.sqrt(var + eps)
    Y = gamma * x_hat + beta
    new_mm = momentum * mm + (1.0 - momentum) * mean   # broadcasts to (1,C,H,W)
    new_mv = momentum * mv + (1.0 - momentum) * var
    return Y, new_mm, new_mv


def _check(X, gamma, beta, mm, mv, **kwargs):
    Y, new_mm, new_mv = batch_norm_forward(X, gamma, beta, mm, mv, **kwargs)
    jax.block_until_ready((Y, new_mm, new_mv))
    Y_ref, mm_ref, mv_ref = _reference(X, gamma, beta, mm, mv)
    N, C, H, W = X.shape
    assert Y.shape == (N, C, H, W)
    assert new_mm.shape == (1, C, H, W) and new_mv.shape == (1, C, H, W)
    assert jnp.allclose(Y, Y_ref, atol=1e-4, rtol=1e-4)
    assert jnp.allclose(new_mm, mm_ref, atol=1e-5, rtol=1e-5)
    assert jnp.allclose(new_mv, mv_ref, atol=1e-5, rtol=1e-5)


if __name__ == "__main__":
    key = jax.random.PRNGKey(0)

    # Primary test: matches the module's conv-layer (num_dims=4) usage.
    N, C, H, W = 2, 4, 16, 16
    X = jax.random.normal(key, (N, C, H, W), dtype=jnp.float32)
    gamma = jnp.ones((1, C, 1, 1), dtype=jnp.float32)
    beta = jnp.zeros((1, C, 1, 1), dtype=jnp.float32)
    moving_mean = jnp.zeros((1, C, 1, 1), dtype=jnp.float32)
    moving_var = jnp.ones((1, C, 1, 1), dtype=jnp.float32)
    _check(X, gamma, beta, moving_mean, moving_var)

    # Second test: non-trivial params, odd channel/batch counts, and a forced small
    # tile so the multi-step pipelined grid with a PARTIAL last S-block is exercised
    # (H*W = 2304 -> S = 18, TS = 8 -> 3 spatial tiles per channel).
    k1, k2, k3, k4, k5 = jax.random.split(key, 5)
    N2, C2, H2, W2 = 3, 5, 48, 48
    X2 = jax.random.normal(k1, (N2, C2, H2, W2), dtype=jnp.float32)
    gamma2 = 1.0 + 0.1 * jax.random.normal(k2, (1, C2, 1, 1), dtype=jnp.float32)
    beta2 = 0.1 * jax.random.normal(k3, (1, C2, 1, 1), dtype=jnp.float32)
    mm2 = 0.1 * jax.random.normal(k4, (1, C2, 1, 1), dtype=jnp.float32)
    mv2 = 1.0 + 0.1 * jnp.abs(jax.random.normal(k5, (1, C2, 1, 1), dtype=jnp.float32))
    _check(X2, gamma2, beta2, mm2, mv2, block_rows=8)

    # Third test: H*W not a multiple of 128 (10*10 = 100) -> zero-padded lane axis path.
    N3, C3, H3, W3 = 2, 3, 10, 10
    X3 = jax.random.normal(k2, (N3, C3, H3, W3), dtype=jnp.float32)
    gamma3 = 1.0 + 0.1 * jax.random.normal(k3, (1, C3, 1, 1), dtype=jnp.float32)
    beta3 = 0.1 * jax.random.normal(k4, (1, C3, 1, 1), dtype=jnp.float32)
    mm3 = 0.1 * jax.random.normal(k5, (1, C3, 1, 1), dtype=jnp.float32)
    mv3 = 1.0 + 0.1 * jnp.abs(jax.random.normal(k1, (1, C3, 1, 1), dtype=jnp.float32))
    _check(X3, gamma3, beta3, mm3, mv3)

    print("KERNEL_OK")
</pallas_src>

<mosaic_0001>
module attributes {stable_mosaic.version = 11 : i64} {
  func.func @_bn_kernel(%arg0: i32, %arg1: i32, %arg2: memref<4xf32, #tpu.memory_space<smem>>, %arg3: memref<4xf32, #tpu.memory_space<smem>>, %arg4: memref<4xf32, #tpu.memory_space<smem>>, %arg5: memref<4xf32, #tpu.memory_space<smem>>, %arg6: memref<2x1x2x128xf32, #tpu.memory_space<vmem>>, %arg7: memref<2x1x2x128xf32, #tpu.memory_space<vmem>>, %arg8: memref<1x1x2x128xf32, #tpu.memory_space<vmem>>, %arg9: memref<1x1x2x128xf32, #tpu.memory_space<vmem>>) attributes {dimension_semantics = [#tpu.dimension_semantics<parallel>, #tpu.dimension_semantics<parallel>], iteration_bounds = array<i64: 4, 1>, scalar_prefetch = 0 : i64, scratch_operands = 0 : i64, tpu.core_type = #tpu.core_type<tc>, window_params = [{transform_indices = @transform_0, window_bounds = array<i64: 4>}, {transform_indices = @transform_1, window_bounds = array<i64: 4>}, {transform_indices = @transform_2, window_bounds = array<i64: 4>}, {transform_indices = @transform_3, window_bounds = array<i64: 4>}, {transform_indices = @transform_4, window_bounds = array<i64: 2, 1, 2, 128>}, {transform_indices = @transform_5, window_bounds = array<i64: 2, 1, 2, 128>}, {transform_indices = @transform_6, window_bounds = array<i64: 1, 1, 2, 128>}, {transform_indices = @transform_7, window_bounds = array<i64: 1, 1, 2, 128>}]} {
    %c0 = arith.constant 0 : index
    %c0_0 = arith.constant 0 : index
    %c0_1 = arith.constant 0 : index
    %c0_2 = arith.constant 0 : index
    %0 = vector.load %arg6[%c0, %c0_0, %c0_1, %c0_2] : memref<2x1x2x128xf32, #tpu.memory_space<vmem>>, vector<2x1x2x128xf32>
    %cst = arith.constant dense<0.000000e+00> : vector<1x2x128xf32>
    %1 = vector.multi_reduction <add>, %0, %cst [0] : vector<2x1x2x128xf32> to vector<1x2x128xf32>
    %2 = vector.shape_cast %1 : vector<1x2x128xf32> to vector<1x1x2x128xf32>
    %cst_3 = arith.constant 5.000000e-01 : f32
    %3 = vector.broadcast %cst_3 : f32 to vector<1x1x2x128xf32>
    %4 = arith.mulf %2, %3 : vector<1x1x2x128xf32>
    %5 = vector.broadcast %4 : vector<1x1x2x128xf32> to vector<2x1x2x128xf32>
    %6 = arith.subf %0, %5 : vector<2x1x2x128xf32>
    %7 = arith.mulf %6, %6 : vector<2x1x2x128xf32>
    %cst_4 = arith.constant dense<0.000000e+00> : vector<1x2x128xf32>
    %8 = vector.multi_reduction <add>, %7, %cst_4 [0] : vector<2x1x2x128xf32> to vector<1x2x128xf32>
    %9 = vector.shape_cast %8 : vector<1x2x128xf32> to vector<1x1x2x128xf32>
    %cst_5 = arith.constant 5.000000e-01 : f32
    %10 = vector.broadcast %cst_5 : f32 to vector<1x1x2x128xf32>
    %11 = arith.mulf %9, %10 : vector<1x1x2x128xf32>
    %12 = arith.index_cast %arg0 : i32 to index
    %13 = memref.load %arg2[%12] : memref<4xf32, #tpu.memory_space<smem>>
    %cst_6 = arith.constant 9.99999974E-6 : f32
    %14 = vector.broadcast %cst_6 : f32 to vector<1x1x2x128xf32>
    %15 = arith.addf %11, %14 : vector<1x1x2x128xf32>
    %16 = math.rsqrt %15 : vector<1x1x2x128xf32>
    %17 = vector.broadcast %13 : f32 to vector<1x1x2x128xf32>
    %18 = arith.mulf %17, %16 : vector<1x1x2x128xf32>
    %19 = vector.broadcast %18 : vector<1x1x2x128xf32> to vector<2x1x2x128xf32>
    %20 = arith.mulf %6, %19 : vector<2x1x2x128xf32>
    %21 = arith.index_cast %arg0 : i32 to index
    %22 = memref.load %arg3[%21] : memref<4xf32, #tpu.memory_space<smem>>
    %23 = vector.broadcast %22 : f32 to vector<2x1x2x128xf32>
    %24 = arith.addf %20, %23 : vector<2x1x2x128xf32>
    %c0_7 = arith.constant 0 : index
    %c0_8 = arith.constant 0 : index
    %c0_9 = arith.constant 0 : index
    %c0_10 = arith.constant 0 : index
    %25 = vector.load %arg7[%c0_7, %c0_8, %c0_9, %c0_10] : memref<2x1x2x128xf32, #tpu.memory_space<vmem>>, vector<2x1x2x128xf32>
    tpu.vector_store %arg7[%c0_7, %c0_8, %c0_9, %c0_10], %24 {strides = array<i32>} : memref<2x1x2x128xf32, #tpu.memory_space<vmem>>, vector<2x1x2x128xf32>,
    %26 = arith.index_cast %arg0 : i32 to index
    %27 = memref.load %arg4[%26] : memref<4xf32, #tpu.memory_space<smem>>
    %cst_11 = arith.constant 0.899999976 : f32
    %28 = arith.mulf %cst_11, %27 : f32
    %cst_12 = arith.constant 1.000000e-01 : f32
    %29 = vector.broadcast %cst_12 : f32 to vector<1x1x2x128xf32>
    %30 = arith.mulf %29, %4 : vector<1x1x2x128xf32>
    %31 = vector.broadcast %28 : f32 to vector<1x1x2x128xf32>
    %32 = arith.addf %31, %30 : vector<1x1x2x128xf32>
    %c0_13 = arith.constant 0 : index
    %c0_14 = arith.constant 0 : index
    %c0_15 = arith.constant 0 : index
    %c0_16 = arith.constant 0 : index
    %33 = vector.load %arg8[%c0_13, %c0_14, %c0_15, %c0_16] : memref<1x1x2x128xf32, #tpu.memory_space<vmem>>, vector<1x1x2x128xf32>
    tpu.vector_store %arg8[%c0_13, %c0_14, %c0_15, %c0_16], %32 {strides = array<i32>} : memref<1x1x2x128xf32, #tpu.memory_space<vmem>>, vector<1x1x2x128xf32>,
    %34 = arith.index_cast %arg0 : i32 to index
    %35 = memref.load %arg5[%34] : memref<4xf32, #tpu.memory_space<smem>>
    %cst_17 = arith.constant 0.899999976 : f32
    %36 = arith.mulf %cst_17, %35 : f32
    %cst_18 = arith.constant 1.000000e-01 : f32
    %37 = vector.broadcast %cst_18 : f32 to vector<1x1x2x128xf32>
    %38 = arith.mulf %37, %11 : vector<1x1x2x128xf32>
    %39 = vector.broadcast %36 : f32 to vector<1x1x2x128xf32>
    %40 = arith.addf %39, %38 : vector<1x1x2x128xf32>
    %c0_19 = arith.constant 0 : index
    %c0_20 = arith.constant 0 : index
    %c0_21 = arith.constant 0 : index
    %c0_22 = arith.constant 0 : index
    %41 = vector.load %arg9[%c0_19, %c0_20, %c0_21, %c0_22] : memref<1x1x2x128xf32, #tpu.memory_space<vmem>>, vector<1x1x2x128xf32>
    tpu.vector_store %arg9[%c0_19, %c0_20, %c0_21, %c0_22], %40 {strides = array<i32>} : memref<1x1x2x128xf32, #tpu.memory_space<vmem>>, vector<1x1x2x128xf32>,
    return
  }
  func.func @transform_0(%arg0: i32, %arg1: i32) -> i32 {
    %c0_i32 = arith.constant 0 : i32
    %c0_i32_0 = arith.constant 0 : i32
    return %c0_i32 : i32
  }
  func.func @transform_1(%arg0: i32, %arg1: i32) -> i32 {
    %c0_i32 = arith.constant 0 : i32
    %c0_i32_0 = arith.constant 0 : i32
    return %c0_i32 : i32
  }
  func.func @transform_2(%arg0: i32, %arg1: i32) -> i32 {
    %c0_i32 = arith.constant 0 : i32
    %c0_i32_0 = arith.constant 0 : i32
    return %c0_i32 : i32
  }
  func.func @transform_3(%arg0: i32, %arg1: i32) -> i32 {
    %c0_i32 = arith.constant 0 : i32
    %c0_i32_0 = arith.constant 0 : i32
    return %c0_i32 : i32
  }
  func.func @transform_4(%arg0: i32, %arg1: i32) -> (i32, i32, i32, i32) {
    %c0_i32 = arith.constant 0 : i32
    %c0_i32_0 = arith.constant 0 : i32
    %c0_i32_1 = arith.constant 0 : i32
    return %c0_i32, %arg0, %arg1, %c0_i32_0 : i32, i32, i32, i32
  }
  func.func @transform_5(%arg0: i32, %arg1: i32) -> (i32, i32, i32, i32) {
    %c0_i32 = arith.constant 0 : i32
    %c0_i32_0 = arith.constant 0 : i32
    %c0_i32_1 = arith.constant 0 : i32
    return %c0_i32, %arg0, %arg1, %c0_i32_0 : i32, i32, i32, i32
  }
  func.func @transform_6(%arg0: i32, %arg1: i32) -> (i32, i32, i32, i32) {
    %c0_i32 = arith.constant 0 : i32
    %c0_i32_0 = arith.constant 0 : i32
    %c0_i32_1 = arith.constant 0 : i32
    return %c0_i32, %arg0, %arg1, %c0_i32_0 : i32, i32, i32, i32
  }
  func.func @transform_7(%arg0: i32, %arg1: i32) -> (i32, i32, i32, i32) {
    %c0_i32 = arith.constant 0 : i32
    %c0_i32_0 = arith.constant 0 : i32
    %c0_i32_1 = arith.constant 0 : i32
    return %c0_i32, %arg0, %arg1, %c0_i32_0 : i32, i32, i32, i32
  }
}

</mosaic_0001>

<llo_original>
// kernel: tpu_custom_call.1
$region0: #{tpu_custom_call.1}
  #allocation0 [shape = 'u32[]', space=smem, size = 0x4, offset = 0x4, fixed_abs, tag = 'smem constant byte address 0x4 - core index']
  #allocation1 [shape = 'u32[144,128]{1,0:T(1,128)}', space=vmem, size = 0x12000, scoped, tag = 'internal scratch']
  %s0 = inlined_call_operand.hbm [shape: f32[4], index: 0, kind: input, shape index: {}]
  %s1 = inlined_call_operand.vmem [shape: f32[4], index: 1, kind: input, shape index: {}]
  %s2 = inlined_call_operand.vmem [shape: f32[4], index: 2, kind: input, shape index: {}]
  %s3 = inlined_call_operand.vmem [shape: f32[4], index: 3, kind: input, shape index: {}]
  %s4 = inlined_call_operand.hbm [shape: f32[2,4,2,128], index: 4, kind: input, shape index: {}]
  %s5 = inlined_call_operand.hbm [shape: f32[2,4,2,128], index: 5, kind: output, shape index: {0}]
  %s6 = inlined_call_operand.hbm [shape: f32[1,4,2,128], index: 6, kind: output, shape index: {1}]
  %s7 = inlined_call_operand.hbm [shape: f32[1,4,2,128], index: 7, kind: output, shape index: {2}]
  %8 = xla_tuple %s5, %s6, %s7
  %s9 = sld [smem:[#allocation0]]
  $region89: #{tpu_custom_call.1} parent=0
    _
  %s11 = ssub.s32 1, %s9
  %s12 = scalar_select 0, %s11, %s9
  $region1: #{tpu_custom_call.1} parent=0
    #allocation2 [shape = 'u8[512]{0}', space=smem, size = 0x200, scoped, tag = 'input window, operand 0, single buffered']
    #allocation3 [shape = 's32[2]{0}', space=sflag, size = 0x8, scoped, tag = 'scoped memory for tpu_custom_call.1']
    #allocation4 [shape = 's32[2]{0}', space=sflag, size = 0x8, scoped, tag = 'scoped memory for tpu_custom_call.1']
    #allocation5 [shape = 's32[2]{0}', space=sflag, size = 0x8, scoped, tag = 'scoped memory for tpu_custom_call.1']
    #allocation6 [shape = 's32[2]{0}', space=sflag, size = 0x8, scoped, tag = 'scoped memory for tpu_custom_call.1']
    #allocation7 [shape = 'u8[512]{0}', space=smem, size = 0x200, scoped, tag = 'input window, operand 1, single buffered']
    #allocation8 [shape = 'u8[512]{0}', space=smem, size = 0x200, scoped, tag = 'input window, operand 2, single buffered']
    #allocation9 [shape = 's32[1]{0}', space=sflag, size = 0x4, scoped, tag = 'scoped memory for tpu_custom_call.1']
    #allocation10 [shape = 'u8[512]{0}', space=smem, size = 0x200, scoped, tag = 'input window, operand 3, single buffered']
    #allocation11 [shape = 'u8[4096]{0}', space=vmem, size = 0x1000, scoped, tag = 'input window, operand 4']
    #allocation12 [shape = 'u8[4096]{0}', space=vmem, size = 0x1000, scoped, tag = 'output window, operand 0']
    #allocation13 [shape = 'u8[2048]{0}', space=vmem, size = 0x800, scoped, tag = 'output window, operand 1']
    #allocation14 [shape = 's32[2]{0}', space=sflag, size = 0x8, scoped, tag = 'scoped memory for tpu_custom_call.1']
    #allocation15 [shape = 'u8[2048]{0}', space=vmem, size = 0x800, scoped, tag = 'output window, operand 2']
    %13 = vsyncpa [#allocation5], 0
    %14 = vsyncpa [#allocation6], 0
    %15 = vsyncpa [#allocation9], 0
    %16 = vsyncpa [#allocation3], 0
    %s17 = scalar_lea.sflag [#allocation3], 1
    %18 = vsyncpa %s17, 0
    %19 = vsyncpa [#allocation4], 0
    %s20 = scalar_lea.sflag [#allocation4], 1
    %21 = vsyncpa %s20, 0
    %22 = vsyncpa [#allocation14], 0
    %s23 = scalar_lea.sflag [#allocation14], 1
    %24 = vsyncpa %s23, 0
    loop: start=0, step=1, limit=6
    $region2: #{tpu_custom_call.1} parent=1 // loop_pre_header
      _
    $region3: #{tpu_custom_call.1} parent=1 // loop_header
      %s26 = sphi 0, %s30
      %p27 = scmp.ge.s32.totalorder %s26, 6
      %s33 = sphi 0, %s45
      %s34 = sphi 0, %s41
      %s35 = sphi 0, %s33
      %s36 = sphi 0, %s34
      %s37 = sphi 0, %s35
      %s38 = sphi 0, %s36
      %s46 = sphi 0, %s46
      %s48 = sphi 0, %s46
      %s49 = sphi 0, %s48
      %s63 = sphi 0, %s49
      %s67 = sphi 0, %s67
      %s69 = sphi 0, %s67
      %s70 = sphi 0, %s69
      %s84 = sphi 0, %s70
      %s88 = sphi 0, %s88
      %s90 = sphi 0, %s88
      %s91 = sphi 0, %s90
      %s105 = sphi 0, %s91
      %s109 = sphi 0, %s109
      %s111 = sphi 0, %s109
      %s112 = sphi 0, %s111
      %s126 = sphi 0, %s112
      %s134 = sphi 0, %s136
      %s137 = sphi 0, %s134
      %s138 = sphi 0, %s137
      %s154 = sphi 0, %s138
      %s162 = sphi 0, %s164
      %s165 = sphi 0, %s162
      %s166 = sphi 0, %s165
      %s182 = sphi 0, %s166
      %s190 = sphi 0, %s192
      %s193 = sphi 0, %s190
      %s194 = sphi 0, %s193
      %s210 = sphi 0, %s194
      %s218 = sphi 0, %s220
      %s221 = sphi 0, %s218
      %s222 = sphi 0, %s221
      %s238 = sphi 0, %s222
    $region4: #{tpu_custom_call.1} parent=1 // loop_header_branch
      %29 = sbr.rel (%p27) target = $region8
    $region5: #{tpu_custom_call.1} parent=1 // loop_body
      %s31 = ssub.s32 %s26, 1
      %s32 = ssub.s32 %s26, 2
      %s39 = sadd.s32 1, %s34
      %p40 = scmp.ge.s32.totalorder %s39, 1
      %s41 = scalar_select %p40, 0, %s39
      %s42 = sadd.s32 1, %s33
      %s43 = scalar_select %p40, %s42, %s33
      %p44 = scmp.ge.s32.totalorder %s43, 4
      %s45 = scalar_select %p44, 0, %s43
      %s47 = sadd.s32 %s46, 1
      %p50 = scmp.eq.s32.totalorder %s26, 3
      %p51 = scmp.ne.s32.totalorder %s46, %s48
      %p52 = scmp.eq.s32.totalorder %s26, 0
      %p53 = por %p51, %p52
      %p54 = scmp.ne.s32.totalorder %s46, %s48
      %p55 = scmp.eq.s32.totalorder %s31, 3
      %p56 = por %p54, %p55
      %p57 = scmp.ne.s32.totalorder %s48, %s49
      %p58 = scmp.eq.s32.totalorder %s31, 0
      %p59 = por %p57, %p58
      %p60 = scmp.ne.s32.totalorder %s48, %s49
      %p61 = scmp.eq.s32.totalorder %s32, 3
      %p62 = por %p60, %p61
      %p64 = scmp.ne.s32.totalorder %s49, %s63
      %p65 = scmp.eq.s32.totalorder %s32, 0
      %p66 = por %p64, %p65
      %s68 = sadd.s32 %s67, 1
      %p71 = scmp.eq.s32.totalorder %s26, 3
      %p72 = scmp.ne.s32.totalorder %s67, %s69
      %p73 = scmp.eq.s32.totalorder %s26, 0
      %p74 = por %p72, %p73
      %p75 = scmp.ne.s32.totalorder %s67, %s69
      %p76 = scmp.eq.s32.totalorder %s31, 3
      %p77 = por %p75, %p76
      %p78 = scmp.ne.s32.totalorder %s69, %s70
      %p79 = scmp.eq.s32.totalorder %s31, 0
      %p80 = por %p78, %p79
      %p81 = scmp.ne.s32.totalorder %s69, %s70
      %p82 = scmp.eq.s32.totalorder %s32, 3
      %p83 = por %p81, %p82
      %p85 = scmp.ne.s32.totalorder %s70, %s84
      %p86 = scmp.eq.s32.totalorder %s32, 0
      %p87 = por %p85, %p86
      %s89 = sadd.s32 %s88, 1
      %p92 = scmp.eq.s32.totalorder %s26, 3
      %p93 = scmp.ne.s32.totalorder %s88, %s90
      %p94 = scmp.eq.s32.totalorder %s26, 0
      %p95 = por %p93, %p94
      %p96 = scmp.ne.s32.totalorder %s88, %s90
      %p97 = scmp.eq.s32.totalorder %s31, 3
      %p98 = por %p96, %p97
      %p99 = scmp.ne.s32.totalorder %s90, %s91
      %p100 = scmp.eq.s32.totalorder %s31, 0
      %p101 = por %p99, %p100
      %p102 = scmp.ne.s32.totalorder %s90, %s91
      %p103 = scmp.eq.s32.totalorder %s32, 3
      %p104 = por %p102, %p103
      %p106 = scmp.ne.s32.totalorder %s91, %s105
      %p107 = scmp.eq.s32.totalorder %s32, 0
      %p108 = por %p106, %p107
      %s110 = sadd.s32 %s109, 1
      %p113 = scmp.eq.s32.totalorder %s26, 3
      %p114 = scmp.ne.s32.totalorder %s109, %s111
      %p115 = scmp.eq.s32.totalorder %s26, 0
      %p116 = por %p114, %p115
      %p117 = scmp.ne.s32.totalorder %s109, %s111
      %p118 = scmp.eq.s32.totalorder %s31, 3
      %p119 = por %p117, %p118
      %p120 = scmp.ne.s32.totalorder %s111, %s112
      %p121 = scmp.eq.s32.totalorder %s31, 0
      %p122 = por %p120, %p121
      %p123 = scmp.ne.s32.totalorder %s111, %s112
      %p124 = scmp.eq.s32.totalorder %s32, 3
      %p125 = por %p123, %p124
      %p127 = scmp.ne.s32.totalorder %s112, %s126
      %p128 = scmp.eq.s32.totalorder %s32, 0
      %p129 = por %p127, %p128
      %s130 = ssub.s32 %s33, %s45
      %s131 = ssub.s32 %s34, %s41
      %s132 = sor.u32 %s130, %s131
      %p133 = scmp.eq.s32.totalorder %s132, 0
      %s135 = sadd.s32 %s134, 1
      %s136 = scalar_select %p133, %s134, %s135
      %p139 = pneg %p133
      %p140 = scmp.eq.s32.totalorder %s26, 3
      %p141 = por %p139, %p140
      %p142 = scmp.ne.s32.totalorder %s134, %s137
      %p143 = scmp.eq.s32.totalorder %s26, 0
      %p144 = por %p142, %p143
      %p145 = scmp.ne.s32.totalorder %s134, %s137
      %p146 = scmp.eq.s32.totalorder %s31, 3
      %p147 = por %p145, %p146
      %p148 = scmp.ne.s32.totalorder %s137, %s138
      %p149 = scmp.eq.s32.totalorder %s31, 0
      %p150 = por %p148, %p149
      %p151 = scmp.ne.s32.totalorder %s137, %s138
      %p152 = scmp.eq.s32.totalorder %s32, 3
      %p153 = por %p151, %p152
      %p155 = scmp.ne.s32.totalorder %s138, %s154
      %p156 = scmp.eq.s32.totalorder %s32, 0
      %p157 = por %p155, %p156
      %s158 = ssub.s32 %s33, %s45
      %s159 = ssub.s32 %s34, %s41
      %s160 = sor.u32 %s158, %s159
      %p161 = scmp.eq.s32.totalorder %s160, 0
      %s163 = sadd.s32 %s162, 1
      %s164 = scalar_select %p161, %s162, %s163
      %p167 = pneg %p161
      %p168 = scmp.eq.s32.totalorder %s26, 3
      %p169 = por %p167, %p168
      %p170 = scmp.ne.s32.totalorder %s162, %s165
      %p171 = scmp.eq.s32.totalorder %s26, 0
      %p172 = por %p170, %p171
      %p173 = scmp.ne.s32.totalorder %s162, %s165
      %p174 = scmp.eq.s32.totalorder %s31, 3
      %p175 = por %p173, %p174
      %p176 = scmp.ne.s32.totalorder %s165, %s166
      %p177 = scmp.eq.s32.totalorder %s31, 0
      %p178 = por %p176, %p177
      %p179 = scmp.ne.s32.totalorder %s165, %s166
      %p180 = scmp.eq.s32.totalorder %s32, 3
      %p181 = por %p179, %p180
      %p183 = scmp.ne.s32.totalorder %s166, %s182
      %p184 = scmp.eq.s32.totalorder %s32, 0
      %p185 = por %p183, %p184
      %s186 = ssub.s32 %s33, %s45
      %s187 = ssub.s32 %s34, %s41
      %s188 = sor.u32 %s186, %s187
      %p189 = scmp.eq.s32.totalorder %s188, 0
      %s191 = sadd.s32 %s190, 1
      %s192 = scalar_select %p189, %s190, %s191
      %p195 = pneg %p189
      %p196 = scmp.eq.s32.totalorder %s26, 3
      %p197 = por %p195, %p196
      %p198 = scmp.ne.s32.totalorder %s190, %s193
      %p199 = scmp.eq.s32.totalorder %s26, 0
      %p200 = por %p198, %p199
      %p201 = scmp.ne.s32.totalorder %s190, %s193
      %p202 = scmp.eq.s32.totalorder %s31, 3
      %p203 = por %p201, %p202
      %p204 = scmp.ne.s32.totalorder %s193, %s194
      %p205 = scmp.eq.s32.totalorder %s31, 0
      %p206 = por %p204, %p205
      %p207 = scmp.ne.s32.totalorder %s193, %s194
      %p208 = scmp.eq.s32.totalorder %s32, 3
      %p209 = por %p207, %p208
      %p211 = scmp.ne.s32.totalorder %s194, %s210
      %p212 = scmp.eq.s32.totalorder %s32, 0
      %p213 = por %p211, %p212
      %s214 = ssub.s32 %s33, %s45
      %s215 = ssub.s32 %s34, %s41
      %s216 = sor.u32 %s214, %s215
      %p217 = scmp.eq.s32.totalorder %s216, 0
      %s219 = sadd.s32 %s218, 1
      %s220 = scalar_select %p217, %s218, %s219
      %p223 = pneg %p217
      %p224 = scmp.eq.s32.totalorder %s26, 3
      %p225 = por %p223, %p224
      %p226 = scmp.ne.s32.totalorder %s218, %s221
      %p227 = scmp.eq.s32.totalorder %s26, 0
      %p228 = por %p226, %p227
      %p229 = scmp.ne.s32.totalorder %s218, %s221
      %p230 = scmp.eq.s32.totalorder %s31, 3
      %p231 = por %p229, %p230
      %p232 = scmp.ne.s32.totalorder %s221, %s222
      %p233 = scmp.eq.s32.totalorder %s31, 0
      %p234 = por %p232, %p233
      %p235 = scmp.ne.s32.totalorder %s221, %s222
      %p236 = scmp.eq.s32.totalorder %s32, 3
      %p237 = por %p235, %p236
      %p239 = scmp.ne.s32.totalorder %s222, %s238
      %p240 = scmp.eq.s32.totalorder %s32, 0
      %p241 = por %p239, %p240
      %p242 = scmp.le.s32.totalorder 1, %s26
      %p243 = scmp.lt.s32.totalorder %s26, 5
      %p244 = pnand %p242, %p243
      %p245 = pneg %p244
      // Predicated region
      $region9: #{tpu_custom_call.1} parent=5 // pred_check
        _
      $region10: #{tpu_custom_call.1} parent=5 // pred_check_branch
        %247 = sbr.rel (%p244) target = $region12
      $region11: #{tpu_custom_call.1} parent=5 // pred_region
        %s248 = ssub.s32 %s26, 1
        // Predicated region
        $region13: #{tpu_custom_call.1} parent=11 // pred_check
          %p249 = pneg %p59
        $region14: #{tpu_custom_call.1} parent=11 // pred_check_branch
          %251 = sbr.rel (%p249) target = $region16
        $region15: #{tpu_custom_call.1} parent=11 // pred_region
          %s253 = ssub.s32 16, 16
          %254 = vsyncadd [#allocation5], %s253
          %257 = dma.hbm_to_smem %s0, 16, [#allocation2], [#allocation5]
        $region16: #{tpu_custom_call.1} parent=11 // pred_fallthru
          _
        // Predicated region
        $region17: #{tpu_custom_call.1} parent=11 // pred_check
          %p258 = pneg %p80
        $region18: #{tpu_custom_call.1} parent=11 // pred_check_branch
          %260 = sbr.rel (%p258) target = $region20
        $region19: #{tpu_custom_call.1} parent=11 // pred_region
          %s262 = ssub.s32 16, 16
          %263 = vsyncadd [#allocation6], %s262
          %s265 = sshll.u32 %s1, 4
          %s266 = int_to_ptr.vmem [resolvable:$true] %s265
          %268 = dma.vmem_to_smem %s266, 16, [#allocation7], [#allocation6]
        $region20: #{tpu_custom_call.1} parent=11 // pred_fallthru
          _
        // Predicated region
        $region21: #{tpu_custom_call.1} parent=11 // pred_check
          %p269 = pneg %p101
        $region22: #{tpu_custom_call.1} parent=11 // pred_check_branch
          %271 = sbr.rel (%p269) target = $region24
        $region23: #{tpu_custom_call.1} parent=11 // pred_region
          %s273 = ssub.s32 16, 16
          %274 = vsyncadd [#allocation9], %s273
          %s276 = sshll.u32 %s2, 4
          %s277 = int_to_ptr.vmem [resolvable:$true] %s276
          %279 = dma.vmem_to_smem %s277, 16, [#allocation8], [#allocation9]
        $region24: #{tpu_custom_call.1} parent=11 // pred_fallthru
          _
        // Predicated region
        $region25: #{tpu_custom_call.1} parent=11 // pred_check
          %p280 = pneg %p122
        $region26: #{tpu_custom_call.1} parent=11 // pred_check_branch
          %282 = sbr.rel (%p280) target = $region28
        $region27: #{tpu_custom_call.1} parent=11 // pred_region
          %s284 = ssub.s32 16, 16
          %285 = vsyncadd [#allocation9], %s284
          %s287 = sshll.u32 %s3, 4
          %s288 = int_to_ptr.vmem [resolvable:$true] %s287
          %290 = dma.vmem_to_smem %s288, 16, [#allocation10], [#allocation9]
        $region28: #{tpu_custom_call.1} parent=11 // pred_fallthru
          _
      $region12: #{tpu_custom_call.1} parent=5 // pred_fallthru
        _
      %p291 = scmp.lt.s32.totalorder %s26, 4
      // Predicated region
      $region29: #{tpu_custom_call.1} parent=5 // pred_check
        %p292 = pneg %p291
      $region30: #{tpu_custom_call.1} parent=5 // pred_check_branch
        %294 = sbr.rel (%p292) target = $region32
      $region31: #{tpu_custom_call.1} parent=5 // pred_region
        // Predicated region
        $region33: #{tpu_custom_call.1} parent=31 // pred_check
          %p295 = pneg %p144
        $region34: #{tpu_custom_call.1} parent=31 // pred_check_branch
          %297 = sbr.rel (%p295) target = $region36
        $region35: #{tpu_custom_call.1} parent=31 // pred_region
          %s298 = sand.u32 %s134, 1
          %s299 = scalar_lea.sflag [#allocation3], %s298
          %s300 = sand.u32 %s134, 1
          %s301 = smul.addr %s300, 4
          %s302 = scalar_lea.vmem [#allocation11], %s301
          %s304 = ssub.s32 64, 64
          %305 = vsyncadd %s299, %s304
          %s306 = sadd.s32 %s34, %s33
          %s307 = smul.addr %s306, 32
          %s308 = scalar_lea.hbm %s4, %s307
          %s309 = sshll.u32 %s302, 4
          %s310 = int_to_ptr.vmem [resolvable:$true] %s309
          %315 = dma.hbm_to_vmem [thread:$0]  %s308, 64, %s310, %s299, 128, 32, 2
        $region36: #{tpu_custom_call.1} parent=31 // pred_fallthru
          _
      $region32: #{tpu_custom_call.1} parent=5 // pred_fallthru
        _
      %p316 = scmp.le.s32.totalorder 1, %s26
      %p317 = scmp.lt.s32.totalorder %s26, 5
      %p318 = pnand %p316, %p317
      %p319 = pneg %p318
      // Predicated region
      $region37: #{tpu_custom_call.1} parent=5 // pred_check
        _
      $region38: #{tpu_custom_call.1} parent=5 // pred_check_branch
        %321 = sbr.rel (%p318) target = $region40
      $region39: #{tpu_custom_call.1} parent=5 // pred_region
        %s322 = ssub.s32 %s26, 1
        // Predicated region
        $region41: #{tpu_custom_call.1} parent=39 // pred_check
          %p323 = pneg %p59
        $region42: #{tpu_custom_call.1} parent=39 // pred_check_branch
          %325 = sbr.rel (%p323) target = $region44
        $region43: #{tpu_custom_call.1} parent=39 // pred_region
          %326 = dma.done [#allocation5], 16
        $region44: #{tpu_custom_call.1} parent=39 // pred_fallthru
          _
        // Predicated region
        $region45: #{tpu_custom_call.1} parent=39 // pred_check
          %p327 = pneg %p80
        $region46: #{tpu_custom_call.1} parent=39 // pred_check_branch
          %329 = sbr.rel (%p327) target = $region48
        $region47: #{tpu_custom_call.1} parent=39 // pred_region
          %330 = dma.done [#allocation6], 16
        $region48: #{tpu_custom_call.1} parent=39 // pred_fallthru
          _
        // Predicated region
        $region49: #{tpu_custom_call.1} parent=39 // pred_check
          %p331 = pneg %p101
        $region50: #{tpu_custom_call.1} parent=39 // pred_check_branch
          %333 = sbr.rel (%p331) target = $region52
        $region51: #{tpu_custom_call.1} parent=39 // pred_region
          %334 = dma.done [#allocation9], 16
        $region52: #{tpu_custom_call.1} parent=39 // pred_fallthru
          _
        // Predicated region
        $region53: #{tpu_custom_call.1} parent=39 // pred_check
          %p335 = pneg %p122
        $region54: #{tpu_custom_call.1} parent=39 // pred_check_branch
          %337 = sbr.rel (%p335) target = $region56
        $region55: #{tpu_custom_call.1} parent=39 // pred_region
          %338 = dma.done [#allocation9], 16
        $region56: #{tpu_custom_call.1} parent=39 // pred_fallthru
          _
        %s339 = sand.u32 %s137, 1
        %s340 = scalar_lea.sflag [#allocation3], %s339
        %s341 = sand.u32 %s137, 1
        %s342 = smul.addr %s341, 4
        %s343 = scalar_lea.vmem [#allocation11], %s342
        // Predicated region
        $region57: #{tpu_custom_call.1} parent=39 // pred_check
          %p344 = pneg %p150
        $region58: #{tpu_custom_call.1} parent=39 // pred_check_branch
          %346 = sbr.rel (%p344) target = $region60
        $region59: #{tpu_custom_call.1} parent=39 // pred_region
          %347 = dma.done %s340, 64
        $region60: #{tpu_custom_call.1} parent=39 // pred_fallthru
          _
        %348 = sfence
        %p349 = pneg %p59
        %p350 = pneg %p56
        %p351 = pneg %p80
        %p352 = pneg %p77
        %p353 = pneg %p101
        %p354 = pneg %p98
        %p355 = pneg %p122
        %p356 = pneg %p119
        %s357 = sand.u32 %s137, 1
        %s358 = scalar_lea.sflag [#allocation3], %s357
        %s359 = sand.u32 %s137, 1
        %s360 = smul.addr %s359, 4
        %s361 = scalar_lea.vmem [#allocation11], %s360
        %p362 = pneg %p150
        %p363 = pneg %p147
        %p364 = pneg %p178
        %p365 = pneg %p175
        %s366 = sand.u32 %s165, 1
        %s367 = scalar_lea.sflag [#allocation4], %s366
        %s368 = sand.u32 %s165, 1
        %s369 = smul.addr %s368, 4
        %s370 = scalar_lea.vmem [#allocation12], %s369
        %p371 = pneg %p206
        %p372 = pneg %p203
        %s373 = sand.u32 %s31, 1
        %s374 = scalar_lea.sflag [#allocation14], %s373
        %s375 = sand.u32 %s193, 1
        %s376 = smul.addr %s375, 2
        %s377 = scalar_lea.vmem [#allocation13], %s376
        %p378 = pneg %p234
        %p379 = pneg %p231
        %s380 = sand.u32 %s31, 1
        %s381 = scalar_lea.sflag [#allocation14], %s380
        %s382 = sand.u32 %s221, 1
        %s383 = smul.addr %s382, 2
        %s384 = scalar_lea.vmem [#allocation15], %s383
        %v385 = vld [vmem:[%s343] sm:$0x3]
        %v386 = vld [vmem:[%s343 + $0x2] sm:$0x3]
        %vm387 = vcmask 1041408
        %v388 = vsel %vm387, %v385, 0.0
        %v389 = vsel %vm387, %v386, 0.0
        %v390 = vadd.f32 %v388, %v389
        %v391 = vmul.f32 %v390, 0.5
        %v392 = vsub.f32 %v385, %v391
        %v393 = vsub.f32 %v386, %v391
        %v394 = vmul.f32 %v392, %v392
        %v395 = vmul.f32 %v393, %v393
        %v396 = vsel %vm387, %v394, 0.0
        %v397 = vsel %vm387, %v395, 0.0
        %v398 = vadd.f32 %v396, %v397
        %v399 = vmul.f32 %v398, 0.5
        %s400 = sld [smem:[#allocation2 + %s35]]
        %v401 = vadd.f32 %v399, 1e-05
        %v402 = vrsqrt.pop %v401
        %v403 = vstv %s400
        %v404 = vmul.f32 %v403, %v402
        %v405 = vmul.f32 %v392, %v404
        %v406 = vmul.f32 %v393, %v404
        %s407 = sld [smem:[#allocation7 + %s35]]
        %v408 = vstv %s407
        %v409 = vadd.f32 %v405, %v408
        %v410 = vadd.f32 %v406, %v408
        %411 = vst [vmem:[%s370] sm:$0x3] %v409
        %412 = vst [vmem:[%s370 + $0x2] sm:$0x3] %v410
        %s413 = sld [smem:[#allocation8 + %s35]]
        %s414 = smul.f32 %s413, 0.9
        %v415 = vmul.f32 %v391, 0.1
        %v416 = vstv %s414
        %v417 = vadd.f32 %v416, %v415
        %418 = vst [vmem:[%s377] sm:$0x3] %v417
        %s419 = sld [smem:[#allocation10 + %s35]]
        %s420 = smul.f32 %s419, 0.9
        %v421 = vmul.f32 %v399, 0.1
        %v422 = vstv %s420
        %v423 = vadd.f32 %v422, %v421
        %424 = vst [vmem:[%s384] sm:$0x3] %v423
        %s425 = sand.u32 %s165, 1
        %s426 = scalar_lea.sflag [#allocation4], %s425
        %s427 = sand.u32 %s165, 1
        %s428 = smul.addr %s427, 4
        %s429 = scalar_lea.vmem [#allocation12], %s428
        %s430 = sand.u32 %s31, 1
        %s431 = scalar_lea.sflag [#allocation14], %s430
        %s432 = sand.u32 %s193, 1
        %s433 = smul.addr %s432, 2
        %s434 = scalar_lea.vmem [#allocation13], %s433
        %s435 = sand.u32 %s31, 1
        %s436 = scalar_lea.sflag [#allocation14], %s435
        %s437 = sand.u32 %s221, 1
        %s438 = smul.addr %s437, 2
        %s439 = scalar_lea.vmem [#allocation15], %s438
        // Predicated region
        $region61: #{tpu_custom_call.1} parent=39 // pred_check
          %p440 = pneg %p175
        $region62: #{tpu_custom_call.1} parent=39 // pred_check_branch
          %442 = sbr.rel (%p440) target = $region64
        $region63: #{tpu_custom_call.1} parent=39 // pred_region
          %s444 = ssub.s32 64, 64
          %445 = vsyncadd %s426, %s444
          %s446 = sadd.s32 %s36, %s35
          %s447 = smul.addr %s446, 32
          %s448 = scalar_lea.hbm %s5, %s447
          %s449 = sshll.u32 %s429, 4
          %s450 = int_to_ptr.vmem [resolvable:$true] %s449
          %455 = dma.vmem_to_hbm [thread:$0]  %s450, 64, %s448, %s426, 32, 128, 2
        $region64: #{tpu_custom_call.1} parent=39 // pred_fallthru
          _
        // Predicated region
        $region65: #{tpu_custom_call.1} parent=39 // pred_check
          %p456 = pneg %p203
        $region66: #{tpu_custom_call.1} parent=39 // pred_check_branch
          %458 = sbr.rel (%p456) target = $region68
        $region67: #{tpu_custom_call.1} parent=39 // pred_region
          %s460 = ssub.s32 32, 32
          %461 = vsyncadd %s431, %s460
          %s462 = sadd.s32 %s36, %s35
          %s463 = smul.addr %s462, 32
          %s464 = scalar_lea.hbm %s6, %s463
          %s466 = sshll.u32 %s434, 4
          %s467 = int_to_ptr.vmem [resolvable:$true] %s466
          %469 = dma.vmem_to_hbm [thread:$0]  %s467, 32, %s464, %s431
        $region68: #{tpu_custom_call.1} parent=39 // pred_fallthru
          _
        // Predicated region
        $region69: #{tpu_custom_call.1} parent=39 // pred_check
          %p470 = pneg %p231
        $region70: #{tpu_custom_call.1} parent=39 // pred_check_branch
          %472 = sbr.rel (%p470) target = $region72
        $region71: #{tpu_custom_call.1} parent=39 // pred_region
          %s474 = ssub.s32 32, 32
          %475 = vsyncadd %s436, %s474
          %s476 = sadd.s32 %s36, %s35
          %s477 = smul.addr %s476, 32
          %s478 = scalar_lea.hbm %s7, %s477
          %s480 = sshll.u32 %s439, 4
          %s481 = int_to_ptr.vmem [resolvable:$true] %s480
          %483 = dma.vmem_to_hbm [thread:$0]  %s481, 32, %s478, %s436
        $region72: #{tpu_custom_call.1} parent=39 // pred_fallthru
          _
      $region40: #{tpu_custom_call.1} parent=5 // pred_fallthru
        _
      %p484 = scmp.le.s32.totalorder 2, %s26
      // Predicated region
      $region73: #{tpu_custom_call.1} parent=5 // pred_check
        %p485 = pneg %p484
      $region74: #{tpu_custom_call.1} parent=5 // pred_check_branch
        %487 = sbr.rel (%p485) target = $region76
      $region75: #{tpu_custom_call.1} parent=5 // pred_region
        %s488 = ssub.s32 %s26, 2
        // Predicated region
        $region77: #{tpu_custom_call.1} parent=75 // pred_check
          %p489 = pneg %p181
        $region78: #{tpu_custom_call.1} parent=75 // pred_check_branch
          %491 = sbr.rel (%p489) target = $region80
        $region79: #{tpu_custom_call.1} parent=75 // pred_region
          %s492 = sand.u32 %s166, 1
          %s493 = scalar_lea.sflag [#allocation4], %s492
          %s494 = sand.u32 %s166, 1
          %s495 = smul.addr %s494, 4
          %s496 = scalar_lea.vmem [#allocation12], %s495
          %497 = dma.done %s493, 64
        $region80: #{tpu_custom_call.1} parent=75 // pred_fallthru
          _
        // Predicated region
        $region81: #{tpu_custom_call.1} parent=75 // pred_check
          %p498 = pneg %p209
        $region82: #{tpu_custom_call.1} parent=75 // pred_check_branch
          %500 = sbr.rel (%p498) target = $region84
        $region83: #{tpu_custom_call.1} parent=75 // pred_region
          %s501 = sand.u32 %s32, 1
          %s502 = scalar_lea.sflag [#allocation14], %s501
          %s503 = sand.u32 %s194, 1
          %s504 = smul.addr %s503, 2
          %s505 = scalar_lea.vmem [#allocation13], %s504
          %506 = dma.done %s502, 32
        $region84: #{tpu_custom_call.1} parent=75 // pred_fallthru
          _
        // Predicated region
        $region85: #{tpu_custom_call.1} parent=75 // pred_check
          %p507 = pneg %p237
        $region86: #{tpu_custom_call.1} parent=75 // pred_check_branch
          %509 = sbr.rel (%p507) target = $region88
        $region87: #{tpu_custom_call.1} parent=75 // pred_region
          %s510 = sand.u32 %s32, 1
          %s511 = scalar_lea.sflag [#allocation14], %s510
          %s512 = sand.u32 %s222, 1
          %s513 = smul.addr %s512, 2
          %s514 = scalar_lea.vmem [#allocation15], %s513
          %515 = dma.done %s511, 32
        $region88: #{tpu_custom_call.1} parent=75 // pred_fallthru
          _
      $region76: #{tpu_custom_call.1} parent=5 // pred_fallthru
        _
    $region6: #{tpu_custom_call.1} parent=1 // loop_footer
      %s30 = sadd.s32 1, %s26
    $region7: #{tpu_custom_call.1} parent=1 // loop_footer_branch
      %25 = sbr.rel target = $region3
    $region8: #{tpu_custom_call.1} parent=1 // loop_exit
      _
    %516 = vsyncpa [#allocation3], 1
    %s517 = scalar_lea.sflag [#allocation3], 1
    %518 = vsyncpa %s517, 1
    %519 = vsyncpa [#allocation4], 1
    %s520 = scalar_lea.sflag [#allocation4], 1
    %521 = vsyncpa %s520, 1
    %522 = vsyncpa [#allocation14], 1
    %s523 = scalar_lea.sflag [#allocation14], 1
    %524 = vsyncpa %s523, 1
    %525 = vsyncpa [#allocation5], 1
    %s526 = scalar_lea.sflag [#allocation5], 1
    %527 = vsyncpa %s526, 1
    %528 = vsyncpa [#allocation6], 1
    %s529 = scalar_lea.sflag [#allocation6], 1
    %530 = vsyncpa %s529, 1
    %531 = vsyncpa [#allocation9], 1

</llo_original>
